<compile_context>
chip_gen: v7x
topology: tpu7x:2x2x1
jax: 0.10.0
libtpu: 0.0.40
codegen_flags: <defaults>
</compile_context>

<pallas_src>
import jax
import jax.numpy as jnp
from jax.experimental import pallas as pl
from jax.experimental.pallas import tpu as pltpu


# ----------------------------------------------------------------------------
# Kernel
# ----------------------------------------------------------------------------
def molecular_gcn_kernel(adj_ref, x_ref, w_init_ref, w_gcn_ref, b_gcn_ref,
                         w_res_ref, b_res_ref, o_ref, a_bd_ref):
    # adj: (tb, N, N)   x: (tb, N, Fin)   w_init: (Fin, D)
    # w_gcn/w_res: (L, D, D)   b_gcn/b_res: (L, 1, D)   o: (tb, N, D)
    # a_bd (scratch): (tb*N, tb*N) bf16 block-diagonal adjacency
    tb, n, _ = adj_ref.shape
    fin = x_ref.shape[-1]
    d = w_init_ref.shape[1]
    num_layers = w_gcn_ref.shape[0]
    rows = tb * n
    cdt = a_bd_ref.dtype                       # bf16 compute dtype for MXU operands

    # ---- assemble block-diagonal adjacency once per grid step -----------------
    # Zero every step (megacore-safe: each core owns a disjoint grid range, so a
    # "zero only on step 0" guard would leave one core's scratch uninitialized).
    a_bd_ref[...] = jnp.zeros_like(a_bd_ref)
    for g in range(tb):                        # static unroll; static slices are free views
        a_bd_ref[g * n:(g + 1) * n, g * n:(g + 1) * n] = adj_ref[g].astype(cdt)
    a_bd = a_bd_ref[...]                       # reused for all L layers

    # ---- init_transform: Linear(in_feats, D, bias=False) ----------------------
    # Padding channel is the already-zeroed last row of the PyTorch weight (last
    # column of w_init here).  All tb graphs are flattened into one matmul.
    x2d = x_ref[...].reshape(rows, fin)
    h = jnp.dot(x2d, w_init_ref[...], preferred_element_type=jnp.float32)  # (rows, d) f32

    # ---- GCN layers ------------------------------------------------------------
    # TODO(synk): for very large tiles (tb*N >> 512) hold h/m in explicit VMEM
    # scratch and row-chunk the dense matmuls to bound vreg live ranges.
    for l in range(num_layers):                # static unroll over layers
        h_c = h.astype(cdt)                    # bf16 operands for the MXU
        # Neighbour aggregation for all tb graphs in a single MXU matmul
        # (block-diagonal A => exactly the per-graph A[b] @ h[b]).
        m = jnp.dot(a_bd, h_c, preferred_element_type=jnp.float32)
        conv = jnp.dot(m.astype(cdt), w_gcn_ref[l],
                       preferred_element_type=jnp.float32) + b_gcn_ref[l]
        res = jnp.dot(h_c, w_res_ref[l],
                      preferred_element_type=jnp.float32) + b_res_ref[l]
        # f32 epilogue: bias add + ReLU on both branches, then combine.
        h = jnp.maximum(conv, 0.0) + jnp.maximum(res, 0.0)
        # dgllife GCNLayer defaults: gnn_norm='none', batchnorm off, dropout p=0.

    o_ref[...] = h.reshape(tb, n, d).astype(o_ref.dtype)


# ----------------------------------------------------------------------------
# Tiling / VMEM sizing helpers
# ----------------------------------------------------------------------------
def _round_up(x, m):
    return (x + m - 1) // m * m


def _tile_vmem_bytes(tb, n, fin, d, num_layers):
    """Coarse per-core VMEM footprint for one grid step (lane-padded)."""
    rows = tb * n
    f32, bf16 = 4, 2

    def buf(r, c, item):
        return _round_up(max(r, 1), 8) * _round_up(max(c, 1), 128) * item

    adj_t = tb * buf(n, n, bf16) * 2                 # double-buffered input tile
    x_t = tb * buf(n, fin, bf16) * 2
    out_t = tb * buf(n, d, f32) * 2
    w = (buf(fin, d, bf16) + 2 * num_layers * buf(d, d, bf16)
         + 2 * num_layers * buf(1, d, f32)) * 2      # weight buffers
    a_bd = buf(rows, rows, bf16)                     # block-diag scratch
    temps = 4 * buf(rows, d, f32)                    # h, m, conv, res temporaries
    return adj_t + x_t + out_t + w + a_bd + temps


def _pick_tile_b(B, N, Fin, D, num_layers, *, target_rows=512, vmem_budget=None):
    """Largest batch tile with tb*N ~ target_rows, >=2 grid steps, VMEM-feasible,
    preferring an even step count so both v7x TensorCores stay balanced."""
    cap = max(8, target_rows // max(N, 1))           # tb*N >= ~512 MXU rows
    cap = min(cap, B)
    if B >= 2:
        cap = min(cap, B // 2)                       # guarantee >= 2 grid steps
    cap = max(cap, 1)
    divisors = [t for t in range(cap, 0, -1) if B % t == 0]
    if vmem_budget is not None:
        fitting = [t for t in divisors
                   if _tile_vmem_bytes(t, N, Fin, D, num_layers) <= vmem_budget]
        if fitting:
            divisors = fitting
    for t in divisors:
        if (B // t) % 2 == 0:                        # even step count preferred
            return t
    return divisors[0]


def _physical_vmem_bytes():
    try:
        return int(pltpu.get_tpu_info().vmem_capacity_bytes)
    except Exception:
        return 64 * 1024 * 1024                      # v7x-conservative fallback


# ----------------------------------------------------------------------------
# Host wrapper
# ----------------------------------------------------------------------------
def molecular_gcn_forward(adj, node_feats, params, *, tile_b=None,
                          compute_dtype=jnp.bfloat16, out_dtype=jnp.float32):
    w_init, w_gcn, b_gcn, w_res, b_res = params
    B, N, Fin = node_feats.shape
    D = w_init.shape[1]
    L = w_gcn.shape[0]
    assert adj.shape == (B, N, N)
    assert w_gcn.shape == (L, D, D) and w_res.shape == (L, D, D)

    phys_vmem = _physical_vmem_bytes()
    budget = phys_vmem * 3 // 4                      # leave headroom for Mosaic
    tb = tile_b if tile_b is not None else _pick_tile_b(B, N, Fin, D, L,
                                                        vmem_budget=budget)
    assert B % tb == 0, "batch must be divisible by the batch tile"
    rows = tb * N

    # bf16 matmul operands (f32 accumulation inside the kernel); biases stay f32.
    # TODO(synk): for production-sized N, ship adj as int8 (0/1) and cast in-kernel
    # to halve the dominant HBM stream; negligible at small N so kept bf16 here.
    adj_c = adj.astype(compute_dtype)
    x_c = node_feats.astype(compute_dtype)
    w_init_c = w_init.astype(compute_dtype)
    w_gcn_c = w_gcn.astype(compute_dtype)
    w_res_c = w_res.astype(compute_dtype)
    b_gcn_f = b_gcn.astype(jnp.float32)
    b_res_f = b_res.astype(jnp.float32)
    operands = (adj_c, x_c, w_init_c, w_gcn_c, b_gcn_f, w_res_c, b_res_f)

    need = _tile_vmem_bytes(tb, N, Fin, D, L)
    vmem_limit = int(max(32 * 1024 * 1024, min(2 * need, budget)))

    # Cost estimate (block-diag aggregation does rows^2*D MACs per layer per tile).
    grid_steps = B // tb
    flops = (2 * B * N * Fin * D                               # init transform
             + 2 * grid_steps * rows * rows * D * L            # aggregation
             + 2 * B * N * D * D * 2 * L)                      # conv + residual
    bytes_accessed = sum(int(a.size) * a.dtype.itemsize for a in operands)
    bytes_accessed += B * N * D * jnp.dtype(out_dtype).itemsize

    out = pl.pallas_call(
        molecular_gcn_kernel,
        out_shape=jax.ShapeDtypeStruct((B, N, D), out_dtype),
        grid_spec=pltpu.PrefetchScalarGridSpec(
            num_scalar_prefetch=0,
            grid=(grid_steps,),
            in_specs=[
                pl.BlockSpec((tb, N, N), lambda i: (i, 0, 0)),    # adjacency tile
                pl.BlockSpec((tb, N, Fin), lambda i: (i, 0, 0)),  # node-feature tile
                # Weights/biases: constant index maps -> fetched once, stay
                # VMEM-resident across grid steps.
                pl.BlockSpec((Fin, D), lambda i: (0, 0)),
                pl.BlockSpec((L, D, D), lambda i: (0, 0, 0)),
                pl.BlockSpec((L, 1, D), lambda i: (0, 0, 0)),
                pl.BlockSpec((L, D, D), lambda i: (0, 0, 0)),
                pl.BlockSpec((L, 1, D), lambda i: (0, 0, 0)),
            ],
            out_specs=pl.BlockSpec((tb, N, D), lambda i: (i, 0, 0)),
            scratch_shapes=[pltpu.VMEM((rows, rows), compute_dtype)],  # block-diag A
        ),
        compiler_params=pltpu.CompilerParams(
            dimension_semantics=("parallel",),     # batch grid sharded over v7x's 2 TCs
            vmem_limit_bytes=vmem_limit,
        ),
        cost_estimate=pl.CostEstimate(flops=int(flops), transcendentals=0,
                                      bytes_accessed=int(bytes_accessed)),
    )(*operands)
    return out   # (B, N, output_feats) == node_feats.view(batch_size, -1, output_feats)


# ----------------------------------------------------------------------------
# Parameter init (mirrors the PyTorch module) and pure-JAX reference
# ----------------------------------------------------------------------------
def init_params(key, in_feats, dim_embedding, hidden_feats, padding=True):
    # Stacked-weight layout assumes uniform GCN widths == dim_embedding
    # (matches the DrugBAN config, e.g. [128, 128, 128]).
    assert all(h == dim_embedding for h in hidden_feats)
    num_layers = len(hidden_feats)
    d = dim_embedding
    keys = jax.random.split(key, 1 + 4 * num_layers)

    # init_transform: nn.Linear(in_feats, dim_embedding, bias=False)
    b_in = in_feats ** -0.5
    w_init = jax.random.uniform(keys[0], (d, in_feats), jnp.float32, -b_in, b_in)
    if padding:
        w_init = w_init.at[-1, :].set(0.0)   # weight[-1].fill_(0): padding channel
    w_init_t = w_init.T                      # (in_feats, d), "x @ W" orientation

    b_d = d ** -0.5
    w_gcn, b_gcn, w_res, b_res = [], [], [], []
    for l in range(num_layers):
        k0, k1, k2, k3 = keys[1 + 4 * l: 1 + 4 * (l + 1)]
        w_gcn.append(jax.random.uniform(k0, (d, d), jnp.float32, -b_d, b_d))
        b_gcn.append(jax.random.uniform(k1, (1, d), jnp.float32, -b_d, b_d))
        w_res.append(jax.random.uniform(k2, (d, d), jnp.float32, -b_d, b_d))
        b_res.append(jax.random.uniform(k3, (1, d), jnp.float32, -b_d, b_d))
    return (w_init_t, jnp.stack(w_gcn), jnp.stack(b_gcn),
            jnp.stack(w_res), jnp.stack(b_res))


def molecular_gcn_reference(adj, node_feats, params, compute_dtype=jnp.bfloat16):
    # Pure-JAX reference mirroring the kernel math (same dtype casts).
    w_init, w_gcn, b_gcn, w_res, b_res = params
    a = adj.astype(compute_dtype)
    h = jnp.einsum('bnf,fd->bnd', node_feats.astype(compute_dtype),
                   w_init.astype(compute_dtype), preferred_element_type=jnp.float32)
    for l in range(w_gcn.shape[0]):
        h_c = h.astype(compute_dtype)
        m = jnp.einsum('bij,bjd->bid', a, h_c, preferred_element_type=jnp.float32)
        conv = jnp.einsum('bnd,de->bne', m.astype(compute_dtype),
                          w_gcn[l].astype(compute_dtype),
                          preferred_element_type=jnp.float32) + b_gcn[l].astype(jnp.float32)
        res = jnp.einsum('bnd,de->bne', h_c, w_res[l].astype(compute_dtype),
                         preferred_element_type=jnp.float32) + b_res[l].astype(jnp.float32)
        h = jnp.maximum(conv, 0.0) + jnp.maximum(res, 0.0)
    return h


if __name__ == "__main__":
    in_feats, dim_embedding = 32, 128
    hidden_feats = [128, 128]          # lane-dense GCN widths; output_feats = 128
    batch, n_nodes = 4, 16             # graphs padded to n_nodes nodes each

    key = jax.random.PRNGKey(0)
    kx, ka, kp = jax.random.split(key, 3)

    node_feats = jax.random.normal(kx, (batch, n_nodes, in_feats), jnp.float32)

    # Deterministic symmetric 0/1 adjacency with self-loops (dense per graph).
    rand = jax.random.bernoulli(ka, 0.3, (batch, n_nodes, n_nodes)).astype(jnp.float32)
    adj = jnp.maximum(rand, jnp.swapaxes(rand, -1, -2))
    adj = jnp.maximum(adj, jnp.eye(n_nodes, dtype=jnp.float32)[None])

    params = init_params(kp, in_feats, dim_embedding, hidden_feats, padding=True)

    out = molecular_gcn_forward(adj, node_feats, params)   # auto tile picker
    jax.block_until_ready(out)

    ref = molecular_gcn_reference(adj, node_feats, params)
    assert out.shape == (batch, n_nodes, hidden_feats[-1])
    assert jnp.allclose(out, ref, atol=1e-2, rtol=1e-2)

    print("KERNEL_OK")
</pallas_src>

<mosaic_0001>
module attributes {stable_mosaic.version = 11 : i64} {
  func.func @molecular_gcn_kernel(%arg0: i32, %arg1: memref<2x16x16xbf16, #tpu.memory_space<vmem>>, %arg2: memref<2x16x32xbf16, #tpu.memory_space<vmem>>, %arg3: memref<32x128xbf16, #tpu.memory_space<vmem>>, %arg4: memref<2x128x128xbf16, #tpu.memory_space<vmem>>, %arg5: memref<2x1x128xf32, #tpu.memory_space<vmem>>, %arg6: memref<2x128x128xbf16, #tpu.memory_space<vmem>>, %arg7: memref<2x1x128xf32, #tpu.memory_space<vmem>>, %arg8: memref<2x16x128xf32, #tpu.memory_space<vmem>>, %arg9: memref<32x32xbf16, #tpu.memory_space<vmem>>) attributes {dimension_semantics = [#tpu.dimension_semantics<parallel>], iteration_bounds = array<i64: 2>, scalar_prefetch = 0 : i64, scratch_operands = 1 : i64, tpu.core_type = #tpu.core_type<tc>, window_params = [{transform_indices = @transform_0, window_bounds = array<i64: 2, 16, 16>}, {transform_indices = @transform_1, window_bounds = array<i64: 2, 16, 32>}, {pipeline_mode = #tpu.pipeline_mode<synchronous>, transform_indices = @transform_2, window_bounds = array<i64: 32, 128>}, {pipeline_mode = #tpu.pipeline_mode<synchronous>, transform_indices = @transform_3, window_bounds = array<i64: 2, 128, 128>}, {pipeline_mode = #tpu.pipeline_mode<synchronous>, transform_indices = @transform_4, window_bounds = array<i64: 2, 1, 128>}, {pipeline_mode = #tpu.pipeline_mode<synchronous>, transform_indices = @transform_5, window_bounds = array<i64: 2, 128, 128>}, {pipeline_mode = #tpu.pipeline_mode<synchronous>, transform_indices = @transform_6, window_bounds = array<i64: 2, 1, 128>}, {transform_indices = @transform_7, window_bounds = array<i64: 2, 16, 128>}]} {
    %cst = arith.constant 0.000000e+00 : bf16
    %0 = vector.broadcast %cst : bf16 to vector<32x32xbf16>
    %c0 = arith.constant 0 : index
    %c0_0 = arith.constant 0 : index
    %1 = vector.load %arg9[%c0, %c0_0] : memref<32x32xbf16, #tpu.memory_space<vmem>>, vector<32x32xbf16>
    tpu.vector_store %arg9[%c0, %c0_0], %0 {strides = array<i32>} : memref<32x32xbf16, #tpu.memory_space<vmem>>, vector<32x32xbf16>,
    %c0_1 = arith.constant 0 : index
    %c0_2 = arith.constant 0 : index
    %c0_3 = arith.constant 0 : index
    %2 = vector.load %arg1[%c0_1, %c0_2, %c0_3] : memref<2x16x16xbf16, #tpu.memory_space<vmem>>, vector<1x16x16xbf16>
    %3 = vector.shape_cast %2 : vector<1x16x16xbf16> to vector<16x16xbf16>
    %c0_4 = arith.constant 0 : index
    %c0_5 = arith.constant 0 : index
    %4 = vector.load %arg9[%c0_4, %c0_5] : memref<32x32xbf16, #tpu.memory_space<vmem>>, vector<16x16xbf16>
    tpu.vector_store %arg9[%c0_4, %c0_5], %3 {strides = array<i32>} : memref<32x32xbf16, #tpu.memory_space<vmem>>, vector<16x16xbf16>,
    %c1 = arith.constant 1 : index
    %c0_6 = arith.constant 0 : index
    %c0_7 = arith.constant 0 : index
    %5 = vector.load %arg1[%c1, %c0_6, %c0_7] : memref<2x16x16xbf16, #tpu.memory_space<vmem>>, vector<1x16x16xbf16>
    %6 = vector.shape_cast %5 : vector<1x16x16xbf16> to vector<16x16xbf16>
    %c16 = arith.constant 16 : index
    %c16_8 = arith.constant 16 : index
    %7 = vector.load %arg9[%c16, %c16_8] : memref<32x32xbf16, #tpu.memory_space<vmem>>, vector<16x16xbf16>
    tpu.vector_store %arg9[%c16, %c16_8], %6 {strides = array<i32>} : memref<32x32xbf16, #tpu.memory_space<vmem>>, vector<16x16xbf16>,
    %c0_9 = arith.constant 0 : index
    %c0_10 = arith.constant 0 : index
    %8 = vector.load %arg9[%c0_9, %c0_10] : memref<32x32xbf16, #tpu.memory_space<vmem>>, vector<32x32xbf16>
    %c0_11 = arith.constant 0 : index
    %c0_12 = arith.constant 0 : index
    %c0_13 = arith.constant 0 : index
    %9 = vector.load %arg2[%c0_11, %c0_12, %c0_13] : memref<2x16x32xbf16, #tpu.memory_space<vmem>>, vector<2x16x32xbf16>
    %10 = vector.shape_cast %9 : vector<2x16x32xbf16> to vector<32x32xbf16>
    %c0_14 = arith.constant 0 : index
    %c0_15 = arith.constant 0 : index
    %11 = vector.load %arg3[%c0_14, %c0_15] : memref<32x128xbf16, #tpu.memory_space<vmem>>, vector<32x128xbf16>
    %cst_16 = arith.constant dense<0.000000e+00> : vector<32x128xf32>
    %12 = tpu.matmul %10, %11, %cst_16 {dimension_numbers = #tpu.dot_dimension_numbers<[1], [0], [0], [1], [0, 0, 1, 1], [], []>} : vector<32x32xbf16>, vector<32x128xbf16>, vector<32x128xf32> -> vector<32x128xf32>
    %13 = arith.truncf %12 : vector<32x128xf32> to vector<32x128xbf16>
    %cst_17 = arith.constant dense<0.000000e+00> : vector<32x128xf32>
    %14 = tpu.matmul %8, %13, %cst_17 {dimension_numbers = #tpu.dot_dimension_numbers<[1], [0], [0], [1], [0, 0, 1, 1], [], []>} : vector<32x32xbf16>, vector<32x128xbf16>, vector<32x128xf32> -> vector<32x128xf32>
    %15 = arith.truncf %14 : vector<32x128xf32> to vector<32x128xbf16>
    %c0_18 = arith.constant 0 : index
    %c0_19 = arith.constant 0 : index
    %c0_20 = arith.constant 0 : index
    %16 = vector.load %arg4[%c0_18, %c0_19, %c0_20] : memref<2x128x128xbf16, #tpu.memory_space<vmem>>, vector<1x128x128xbf16>
    %17 = vector.shape_cast %16 : vector<1x128x128xbf16> to vector<128x128xbf16>
    %cst_21 = arith.constant dense<0.000000e+00> : vector<32x128xf32>
    %18 = tpu.matmul %15, %17, %cst_21 {dimension_numbers = #tpu.dot_dimension_numbers<[1], [0], [0], [1], [0, 0, 1, 1], [], []>} : vector<32x128xbf16>, vector<128x128xbf16>, vector<32x128xf32> -> vector<32x128xf32>
    %c0_22 = arith.constant 0 : index
    %c0_23 = arith.constant 0 : index
    %c0_24 = arith.constant 0 : index
    %19 = vector.load %arg5[%c0_22, %c0_23, %c0_24] : memref<2x1x128xf32, #tpu.memory_space<vmem>>, vector<1x1x128xf32>
    %20 = vector.shape_cast %19 : vector<1x1x128xf32> to vector<1x128xf32>
    %21 = vector.broadcast %20 : vector<1x128xf32> to vector<32x128xf32>
    %22 = arith.addf %18, %21 : vector<32x128xf32>
    %c0_25 = arith.constant 0 : index
    %c0_26 = arith.constant 0 : index
    %c0_27 = arith.constant 0 : index
    %23 = vector.load %arg6[%c0_25, %c0_26, %c0_27] : memref<2x128x128xbf16, #tpu.memory_space<vmem>>, vector<1x128x128xbf16>
    %24 = vector.shape_cast %23 : vector<1x128x128xbf16> to vector<128x128xbf16>
    %cst_28 = arith.constant dense<0.000000e+00> : vector<32x128xf32>
    %25 = tpu.matmul %13, %24, %cst_28 {dimension_numbers = #tpu.dot_dimension_numbers<[1], [0], [0], [1], [0, 0, 1, 1], [], []>} : vector<32x128xbf16>, vector<128x128xbf16>, vector<32x128xf32> -> vector<32x128xf32>
    %c0_29 = arith.constant 0 : index
    %c0_30 = arith.constant 0 : index
    %c0_31 = arith.constant 0 : index
    %26 = vector.load %arg7[%c0_29, %c0_30, %c0_31] : memref<2x1x128xf32, #tpu.memory_space<vmem>>, vector<1x1x128xf32>
    %27 = vector.shape_cast %26 : vector<1x1x128xf32> to vector<1x128xf32>
    %28 = vector.broadcast %27 : vector<1x128xf32> to vector<32x128xf32>
    %29 = arith.addf %25, %28 : vector<32x128xf32>
    %cst_32 = arith.constant 0.000000e+00 : f32
    %30 = vector.broadcast %cst_32 : f32 to vector<32x128xf32>
    %31 = arith.maximumf %22, %30 : vector<32x128xf32>
    %cst_33 = arith.constant 0.000000e+00 : f32
    %32 = vector.broadcast %cst_33 : f32 to vector<32x128xf32>
    %33 = arith.maximumf %29, %32 : vector<32x128xf32>
    %34 = arith.addf %31, %33 : vector<32x128xf32>
    %35 = arith.truncf %34 : vector<32x128xf32> to vector<32x128xbf16>
    %cst_34 = arith.constant dense<0.000000e+00> : vector<32x128xf32>
    %36 = tpu.matmul %8, %35, %cst_34 {dimension_numbers = #tpu.dot_dimension_numbers<[1], [0], [0], [1], [0, 0, 1, 1], [], []>} : vector<32x32xbf16>, vector<32x128xbf16>, vector<32x128xf32> -> vector<32x128xf32>
    %37 = arith.truncf %36 : vector<32x128xf32> to vector<32x128xbf16>
    %c1_35 = arith.constant 1 : index
    %c0_36 = arith.constant 0 : index
    %c0_37 = arith.constant 0 : index
    %38 = vector.load %arg4[%c1_35, %c0_36, %c0_37] : memref<2x128x128xbf16, #tpu.memory_space<vmem>>, vector<1x128x128xbf16>
    %39 = vector.shape_cast %38 : vector<1x128x128xbf16> to vector<128x128xbf16>
    %cst_38 = arith.constant dense<0.000000e+00> : vector<32x128xf32>
    %40 = tpu.matmul %37, %39, %cst_38 {dimension_numbers = #tpu.dot_dimension_numbers<[1], [0], [0], [1], [0, 0, 1, 1], [], []>} : vector<32x128xbf16>, vector<128x128xbf16>, vector<32x128xf32> -> vector<32x128xf32>
    %c1_39 = arith.constant 1 : index
    %c0_40 = arith.constant 0 : index
    %c0_41 = arith.constant 0 : index
    %41 = vector.load %arg5[%c1_39, %c0_40, %c0_41] : memref<2x1x128xf32, #tpu.memory_space<vmem>>, vector<1x1x128xf32>
    %42 = vector.shape_cast %41 : vector<1x1x128xf32> to vector<1x128xf32>
    %43 = vector.broadcast %42 : vector<1x128xf32> to vector<32x128xf32>
    %44 = arith.addf %40, %43 : vector<32x128xf32>
    %c1_42 = arith.constant 1 : index
    %c0_43 = arith.constant 0 : index
    %c0_44 = arith.constant 0 : index
    %45 = vector.load %arg6[%c1_42, %c0_43, %c0_44] : memref<2x128x128xbf16, #tpu.memory_space<vmem>>, vector<1x128x128xbf16>
    %46 = vector.shape_cast %45 : vector<1x128x128xbf16> to vector<128x128xbf16>
    %cst_45 = arith.constant dense<0.000000e+00> : vector<32x128xf32>
    %47 = tpu.matmul %35, %46, %cst_45 {dimension_numbers = #tpu.dot_dimension_numbers<[1], [0], [0], [1], [0, 0, 1, 1], [], []>} : vector<32x128xbf16>, vector<128x128xbf16>, vector<32x128xf32> -> vector<32x128xf32>
    %c1_46 = arith.constant 1 : index
    %c0_47 = arith.constant 0 : index
    %c0_48 = arith.constant 0 : index
    %48 = vector.load %arg7[%c1_46, %c0_47, %c0_48] : memref<2x1x128xf32, #tpu.memory_space<vmem>>, vector<1x1x128xf32>
    %49 = vector.shape_cast %48 : vector<1x1x128xf32> to vector<1x128xf32>
    %50 = vector.broadcast %49 : vector<1x128xf32> to vector<32x128xf32>
    %51 = arith.addf %47, %50 : vector<32x128xf32>
    %cst_49 = arith.constant 0.000000e+00 : f32
    %52 = vector.broadcast %cst_49 : f32 to vector<32x128xf32>
    %53 = arith.maximumf %44, %52 : vector<32x128xf32>
    %cst_50 = arith.constant 0.000000e+00 : f32
    %54 = vector.broadcast %cst_50 : f32 to vector<32x128xf32>
    %55 = arith.maximumf %51, %54 : vector<32x128xf32>
    %56 = arith.addf %53, %55 : vector<32x128xf32>
    %57 = vector.shape_cast %56 : vector<32x128xf32> to vector<2x16x128xf32>
    %c0_51 = arith.constant 0 : index
    %c0_52 = arith.constant 0 : index
    %c0_53 = arith.constant 0 : index
    %58 = vector.load %arg8[%c0_51, %c0_52, %c0_53] : memref<2x16x128xf32, #tpu.memory_space<vmem>>, vector<2x16x128xf32>
    tpu.vector_store %arg8[%c0_51, %c0_52, %c0_53], %57 {strides = array<i32>} : memref<2x16x128xf32, #tpu.memory_space<vmem>>, vector<2x16x128xf32>,
    return
  }
  func.func @transform_0(%arg0: i32) -> (i32, i32, i32) {
    %c0_i32 = arith.constant 0 : i32
    %c0_i32_0 = arith.constant 0 : i32
    %c0_i32_1 = arith.constant 0 : i32
    return %arg0, %c0_i32, %c0_i32_0 : i32, i32, i32
  }
  func.func @transform_1(%arg0: i32) -> (i32, i32, i32) {
    %c0_i32 = arith.constant 0 : i32
    %c0_i32_0 = arith.constant 0 : i32
    %c0_i32_1 = arith.constant 0 : i32
    return %arg0, %c0_i32, %c0_i32_0 : i32, i32, i32
  }
  func.func @transform_2(%arg0: i32) -> (i32, i32) {
    %c0_i32 = arith.constant 0 : i32
    %c0_i32_0 = arith.constant 0 : i32
    %c0_i32_1 = arith.constant 0 : i32
    return %c0_i32, %c0_i32_0 : i32, i32
  }
  func.func @transform_3(%arg0: i32) -> (i32, i32, i32) {
    %c0_i32 = arith.constant 0 : i32
    %c0_i32_0 = arith.constant 0 : i32
    %c0_i32_1 = arith.constant 0 : i32
    %c0_i32_2 = arith.constant 0 : i32
    return %c0_i32, %c0_i32_0, %c0_i32_1 : i32, i32, i32
  }
  func.func @transform_4(%arg0: i32) -> (i32, i32, i32) {
    %c0_i32 = arith.constant 0 : i32
    %c0_i32_0 = arith.constant 0 : i32
    %c0_i32_1 = arith.constant 0 : i32
    %c0_i32_2 = arith.constant 0 : i32
    return %c0_i32, %c0_i32_0, %c0_i32_1 : i32, i32, i32
  }
  func.func @transform_5(%arg0: i32) -> (i32, i32, i32) {
    %c0_i32 = arith.constant 0 : i32
    %c0_i32_0 = arith.constant 0 : i32
    %c0_i32_1 = arith.constant 0 : i32
    %c0_i32_2 = arith.constant 0 : i32
    return %c0_i32, %c0_i32_0, %c0_i32_1 : i32, i32, i32
  }
  func.func @transform_6(%arg0: i32) -> (i32, i32, i32) {
    %c0_i32 = arith.constant 0 : i32
    %c0_i32_0 = arith.constant 0 : i32
    %c0_i32_1 = arith.constant 0 : i32
    %c0_i32_2 = arith.constant 0 : i32
    return %c0_i32, %c0_i32_0, %c0_i32_1 : i32, i32, i32
  }
  func.func @transform_7(%arg0: i32) -> (i32, i32, i32) {
    %c0_i32 = arith.constant 0 : i32
    %c0_i32_0 = arith.constant 0 : i32
    %c0_i32_1 = arith.constant 0 : i32
    return %arg0, %c0_i32, %c0_i32_0 : i32, i32, i32
  }
}

</mosaic_0001>

<llo_original>
// kernel: tpu_custom_call.1
$region0: #{tpu_custom_call.1}
  #allocation0 [shape = 'u32[]', space=smem, size = 0x4, offset = 0x4, fixed_abs, tag = 'smem constant byte address 0x4 - core index']
  #allocation1 [shape = 'u32[144,128]{1,0:T(1,128)}', space=vmem, size = 0x12000, scoped, tag = 'internal scratch']
  #allocation2 [shape = 'bf16[32,32]{1,0:T(16,128)(2,1)}', space=vmem, size = 0x2000, scoped, tag = 'scratch operand']
  %s0 = inlined_call_operand.hbm [shape: bf16[4,16,16], index: 0, kind: input, shape index: {}]
  %s1 = inlined_call_operand.hbm [shape: bf16[4,16,32], index: 1, kind: input, shape index: {}]
  %s2 = inlined_call_operand.hbm [shape: bf16[32,128], index: 2, kind: input, shape index: {}]
  %s3 = inlined_call_operand.hbm [shape: bf16[2,128,128], index: 3, kind: input, shape index: {}]
  %s4 = inlined_call_operand.vmem [shape: f32[2,1,128], index: 4, kind: input, shape index: {}]
  %s5 = inlined_call_operand.hbm [shape: bf16[2,128,128], index: 5, kind: input, shape index: {}]
  %s6 = inlined_call_operand.vmem [shape: f32[2,1,128], index: 6, kind: input, shape index: {}]
  %s7 = inlined_call_operand.hbm [shape: f32[4,16,128], index: 7, kind: output, shape index: {}]
  %s8 = sld [smem:[#allocation0]]
  $region81: #{tpu_custom_call.1} parent=0
    _
  %s10 = ssub.s32 1, %s8
  %s11 = scalar_select 0, %s10, %s8
  $region1: #{tpu_custom_call.1} parent=0
    #allocation3 [shape = 'u8[16384]{0}', space=vmem, size = 0x4000, scoped, tag = 'input window, operand 0']
    #allocation4 [shape = 's32[2]{0}', space=sflag, size = 0x8, scoped, tag = 'scoped memory for tpu_custom_call.1']
    #allocation5 [shape = 's32[2]{0}', space=sflag, size = 0x8, scoped, tag = 'scoped memory for tpu_custom_call.1']
    #allocation6 [shape = 'u8[16384]{0}', space=vmem, size = 0x4000, scoped, tag = 'input window, operand 1']
    #allocation7 [shape = 's32[2]{0}', space=sflag, size = 0x8, scoped, tag = 'scoped memory for tpu_custom_call.1']
    #allocation8 [shape = 'u8[8192]{0}', space=vmem, size = 0x2000, scoped, tag = 'input window, operand 2, single buffered']
    #allocation9 [shape = 'u8[65536]{0}', space=vmem, size = 0x10000, scoped, tag = 'input window, operand 3, single buffered']
    #allocation10 [shape = 's32[1]{0}', space=sflag, size = 0x4, scoped, tag = 'scoped memory for tpu_custom_call.1']
    #allocation11 [shape = 'u8[65536]{0}', space=vmem, size = 0x10000, scoped, tag = 'input window, operand 5, single buffered']
    #allocation12 [shape = 'u8[32768]{0}', space=vmem, size = 0x8000, scoped, tag = 'output window, operand 0']
    %12 = vsyncpa [#allocation4], 0
    %s13 = scalar_lea.sflag [#allocation4], 1
    %14 = vsyncpa %s13, 0
    %15 = vsyncpa [#allocation7], 0
    %s16 = scalar_lea.sflag [#allocation7], 1
    %17 = vsyncpa %s16, 0
    %18 = vsyncpa [#allocation10], 0
    %19 = vsyncpa [#allocation5], 0
    %s20 = scalar_lea.sflag [#allocation5], 1
    %21 = vsyncpa %s20, 0
    loop: start=0, step=1, limit=4
    $region2: #{tpu_custom_call.1} parent=1 // loop_pre_header
      _
    $region3: #{tpu_custom_call.1} parent=1 // loop_header
      %s23 = sphi 0, %s27
      %p24 = scmp.ge.s32.totalorder %s23, 4
      %s33 = sphi 0, %s35
      %s36 = sphi 0, %s33
      %s37 = sphi 0, %s36
      %s53 = sphi 0, %s37
      %s59 = sphi 0, %s61
      %s62 = sphi 0, %s59
      %s63 = sphi 0, %s62
      %s79 = sphi 0, %s63
      %s83 = sphi 0, %s83
      %s85 = sphi 0, %s83
      %s86 = sphi 0, %s85
      %s100 = sphi 0, %s86
      %s104 = sphi 0, %s104
      %s106 = sphi 0, %s104
      %s107 = sphi 0, %s106
      %s121 = sphi 0, %s107
      %s125 = sphi 0, %s125
      %s127 = sphi 0, %s125
      %s128 = sphi 0, %s127
      %s142 = sphi 0, %s128
      %s146 = sphi 0, %s146
      %s148 = sphi 0, %s146
      %s149 = sphi 0, %s148
      %s163 = sphi 0, %s149
      %s167 = sphi 0, %s167
      %s169 = sphi 0, %s167
      %s170 = sphi 0, %s169
      %s184 = sphi 0, %s170
      %s190 = sphi 0, %s192
      %s193 = sphi 0, %s190
      %s194 = sphi 0, %s193
      %s210 = sphi 0, %s194
    $region4: #{tpu_custom_call.1} parent=1 // loop_header_branch
      %26 = sbr.rel (%p24) target = $region8
    $region5: #{tpu_custom_call.1} parent=1 // loop_body
      %s28 = ssub.s32 %s23, 1
      %s29 = ssub.s32 %s23, 2
      %s30 = sadd.s32 %s23, 1
      %s31 = ssub.s32 %s23, %s30
      %p32 = scmp.eq.s32.totalorder %s31, 0
      %s34 = sadd.s32 %s33, 1
      %s35 = scalar_select %p32, %s33, %s34
      %p38 = pneg %p32
      %p39 = scmp.eq.s32.totalorder %s23, 1
      %p40 = por %p38, %p39
      %p41 = scmp.ne.s32.totalorder %s33, %s36
      %p42 = scmp.eq.s32.totalorder %s23, 0
      %p43 = por %p41, %p42
      %p44 = scmp.ne.s32.totalorder %s33, %s36
      %p45 = scmp.eq.s32.totalorder %s28, 1
      %p46 = por %p44, %p45
      %p47 = scmp.ne.s32.totalorder %s36, %s37
      %p48 = scmp.eq.s32.totalorder %s28, 0
      %p49 = por %p47, %p48
      %p50 = scmp.ne.s32.totalorder %s36, %s37
      %p51 = scmp.eq.s32.totalorder %s29, 1
      %p52 = por %p50, %p51
      %p54 = scmp.ne.s32.totalorder %s37, %s53
      %p55 = scmp.eq.s32.totalorder %s29, 0
      %p56 = por %p54, %p55
      %s57 = ssub.s32 %s23, %s30
      %p58 = scmp.eq.s32.totalorder %s57, 0
      %s60 = sadd.s32 %s59, 1
      %s61 = scalar_select %p58, %s59, %s60
      %p64 = pneg %p58
      %p65 = scmp.eq.s32.totalorder %s23, 1
      %p66 = por %p64, %p65
      %p67 = scmp.ne.s32.totalorder %s59, %s62
      %p68 = scmp.eq.s32.totalorder %s23, 0
      %p69 = por %p67, %p68
      %p70 = scmp.ne.s32.totalorder %s59, %s62
      %p71 = scmp.eq.s32.totalorder %s28, 1
      %p72 = por %p70, %p71
      %p73 = scmp.ne.s32.totalorder %s62, %s63
      %p74 = scmp.eq.s32.totalorder %s28, 0
      %p75 = por %p73, %p74
      %p76 = scmp.ne.s32.totalorder %s62, %s63
      %p77 = scmp.eq.s32.totalorder %s29, 1
      %p78 = por %p76, %p77
      %p80 = scmp.ne.s32.totalorder %s63, %s79
      %p81 = scmp.eq.s32.totalorder %s29, 0
      %p82 = por %p80, %p81
      %s84 = sadd.s32 %s83, 1
      %p87 = scmp.eq.s32.totalorder %s23, 1
      %p88 = scmp.ne.s32.totalorder %s83, %s85
      %p89 = scmp.eq.s32.totalorder %s23, 0
      %p90 = por %p88, %p89
      %p91 = scmp.ne.s32.totalorder %s83, %s85
      %p92 = scmp.eq.s32.totalorder %s28, 1
      %p93 = por %p91, %p92
      %p94 = scmp.ne.s32.totalorder %s85, %s86
      %p95 = scmp.eq.s32.totalorder %s28, 0
      %p96 = por %p94, %p95
      %p97 = scmp.ne.s32.totalorder %s85, %s86
      %p98 = scmp.eq.s32.totalorder %s29, 1
      %p99 = por %p97, %p98
      %p101 = scmp.ne.s32.totalorder %s86, %s100
      %p102 = scmp.eq.s32.totalorder %s29, 0
      %p103 = por %p101, %p102
      %s105 = sadd.s32 %s104, 1
      %p108 = scmp.eq.s32.totalorder %s23, 1
      %p109 = scmp.ne.s32.totalorder %s104, %s106
      %p110 = scmp.eq.s32.totalorder %s23, 0
      %p111 = por %p109, %p110
      %p112 = scmp.ne.s32.totalorder %s104, %s106
      %p113 = scmp.eq.s32.totalorder %s28, 1
      %p114 = por %p112, %p113
      %p115 = scmp.ne.s32.totalorder %s106, %s107
      %p116 = scmp.eq.s32.totalorder %s28, 0
      %p117 = por %p115, %p116
      %p118 = scmp.ne.s32.totalorder %s106, %s107
      %p119 = scmp.eq.s32.totalorder %s29, 1
      %p120 = por %p118, %p119
      %p122 = scmp.ne.s32.totalorder %s107, %s121
      %p123 = scmp.eq.s32.totalorder %s29, 0
      %p124 = por %p122, %p123
      %s126 = sadd.s32 %s125, 1
      %p129 = scmp.eq.s32.totalorder %s23, 1
      %p130 = scmp.ne.s32.totalorder %s125, %s127
      %p131 = scmp.eq.s32.totalorder %s23, 0
      %p132 = por %p130, %p131
      %p133 = scmp.ne.s32.totalorder %s125, %s127
      %p134 = scmp.eq.s32.totalorder %s28, 1
      %p135 = por %p133, %p134
      %p136 = scmp.ne.s32.totalorder %s127, %s128
      %p137 = scmp.eq.s32.totalorder %s28, 0
      %p138 = por %p136, %p137
      %p139 = scmp.ne.s32.totalorder %s127, %s128
      %p140 = scmp.eq.s32.totalorder %s29, 1
      %p141 = por %p139, %p140
      %p143 = scmp.ne.s32.totalorder %s128, %s142
      %p144 = scmp.eq.s32.totalorder %s29, 0
      %p145 = por %p143, %p144
      %s147 = sadd.s32 %s146, 1
      %p150 = scmp.eq.s32.totalorder %s23, 1
      %p151 = scmp.ne.s32.totalorder %s146, %s148
      %p152 = scmp.eq.s32.totalorder %s23, 0
      %p153 = por %p151, %p152
      %p154 = scmp.ne.s32.totalorder %s146, %s148
      %p155 = scmp.eq.s32.totalorder %s28, 1
      %p156 = por %p154, %p155
      %p157 = scmp.ne.s32.totalorder %s148, %s149
      %p158 = scmp.eq.s32.totalorder %s28, 0
      %p159 = por %p157, %p158
      %p160 = scmp.ne.s32.totalorder %s148, %s149
      %p161 = scmp.eq.s32.totalorder %s29, 1
      %p162 = por %p160, %p161
      %p164 = scmp.ne.s32.totalorder %s149, %s163
      %p165 = scmp.eq.s32.totalorder %s29, 0
      %p166 = por %p164, %p165
      %s168 = sadd.s32 %s167, 1
      %p171 = scmp.eq.s32.totalorder %s23, 1
      %p172 = scmp.ne.s32.totalorder %s167, %s169
      %p173 = scmp.eq.s32.totalorder %s23, 0
      %p174 = por %p172, %p173
      %p175 = scmp.ne.s32.totalorder %s167, %s169
      %p176 = scmp.eq.s32.totalorder %s28, 1
      %p177 = por %p175, %p176
      %p178 = scmp.ne.s32.totalorder %s169, %s170
      %p179 = scmp.eq.s32.totalorder %s28, 0
      %p180 = por %p178, %p179
      %p181 = scmp.ne.s32.totalorder %s169, %s170
      %p182 = scmp.eq.s32.totalorder %s29, 1
      %p183 = por %p181, %p182
      %p185 = scmp.ne.s32.totalorder %s170, %s184
      %p186 = scmp.eq.s32.totalorder %s29, 0
      %p187 = por %p185, %p186
      %s188 = ssub.s32 %s23, %s30
      %p189 = scmp.eq.s32.totalorder %s188, 0
      %s191 = sadd.s32 %s190, 1
      %s192 = scalar_select %p189, %s190, %s191
      %p195 = pneg %p189
      %p196 = scmp.eq.s32.totalorder %s23, 1
      %p197 = por %p195, %p196
      %p198 = scmp.ne.s32.totalorder %s190, %s193
      %p199 = scmp.eq.s32.totalorder %s23, 0
      %p200 = por %p198, %p199
      %p201 = scmp.ne.s32.totalorder %s190, %s193
      %p202 = scmp.eq.s32.totalorder %s28, 1
      %p203 = por %p201, %p202
      %p204 = scmp.ne.s32.totalorder %s193, %s194
      %p205 = scmp.eq.s32.totalorder %s28, 0
      %p206 = por %p204, %p205
      %p207 = scmp.ne.s32.totalorder %s193, %s194
      %p208 = scmp.eq.s32.totalorder %s29, 1
      %p209 = por %p207, %p208
      %p211 = scmp.ne.s32.totalorder %s194, %s210
      %p212 = scmp.eq.s32.totalorder %s29, 0
      %p213 = por %p211, %p212
      %p214 = scmp.le.s32.totalorder 1, %s23
      %p215 = scmp.lt.s32.totalorder %s23, 3
      %p216 = pnand %p214, %p215
      %p217 = pneg %p216
      // Predicated region
      $region9: #{tpu_custom_call.1} parent=5 // pred_check
        _
      $region10: #{tpu_custom_call.1} parent=5 // pred_check_branch
        %219 = sbr.rel (%p216) target = $region12
      $region11: #{tpu_custom_call.1} parent=5 // pred_region
        %s220 = ssub.s32 %s23, 1
        // Predicated region
        $region13: #{tpu_custom_call.1} parent=11 // pred_check
          %p221 = pneg %p96
        $region14: #{tpu_custom_call.1} parent=11 // pred_check_branch
          %223 = sbr.rel (%p221) target = $region16
        $region15: #{tpu_custom_call.1} parent=11 // pred_region
          %s225 = ssub.s32 256, 256
          %226 = vsyncadd [#allocation7], %s225
          %s227 = sshll.u32 [#allocation8], 4
          %s228 = int_to_ptr.vmem [resolvable:$true] %s227
          %233 = dma.hbm_to_vmem [thread:$0]  %s2, 256, %s228, [#allocation7], 64, 64, 4
        $region16: #{tpu_custom_call.1} parent=11 // pred_fallthru
          _
        // Predicated region
        $region17: #{tpu_custom_call.1} parent=11 // pred_check
          %p234 = pneg %p117
        $region18: #{tpu_custom_call.1} parent=11 // pred_check_branch
          %236 = sbr.rel (%p234) target = $region20
        $region19: #{tpu_custom_call.1} parent=11 // pred_region
          %s238 = ssub.s32 2048, 2048
          %239 = vsyncadd [#allocation10], %s238
          %s240 = sshll.u32 [#allocation9], 4
          %s241 = int_to_ptr.vmem [resolvable:$true] %s240
          %246 = dma.hbm_to_vmem [thread:$0]  %s3, 2048, %s241, [#allocation10], 64, 64, 4
        $region20: #{tpu_custom_call.1} parent=11 // pred_fallthru
          _
        // Predicated region
        $region21: #{tpu_custom_call.1} parent=11 // pred_check
          %p247 = pneg %p138
        $region22: #{tpu_custom_call.1} parent=11 // pred_check_branch
          %249 = sbr.rel (%p247) target = $region24
        $region23: #{tpu_custom_call.1} parent=11 // pred_region
          _
        $region24: #{tpu_custom_call.1} parent=11 // pred_fallthru
          _
        // Predicated region
        $region25: #{tpu_custom_call.1} parent=11 // pred_check
          %p250 = pneg %p159
        $region26: #{tpu_custom_call.1} parent=11 // pred_check_branch
          %252 = sbr.rel (%p250) target = $region28
        $region27: #{tpu_custom_call.1} parent=11 // pred_region
          %s254 = ssub.s32 2048, 2048
          %255 = vsyncadd [#allocation10], %s254
          %s256 = sshll.u32 [#allocation11], 4
          %s257 = int_to_ptr.vmem [resolvable:$true] %s256
          %262 = dma.hbm_to_vmem [thread:$0]  %s5, 2048, %s257, [#allocation10], 64, 64, 4
        $region28: #{tpu_custom_call.1} parent=11 // pred_fallthru
          _
        // Predicated region
        $region29: #{tpu_custom_call.1} parent=11 // pred_check
          %p263 = pneg %p180
        $region30: #{tpu_custom_call.1} parent=11 // pred_check_branch
          %265 = sbr.rel (%p263) target = $region32
        $region31: #{tpu_custom_call.1} parent=11 // pred_region
          _
        $region32: #{tpu_custom_call.1} parent=11 // pred_fallthru
          _
      $region12: #{tpu_custom_call.1} parent=5 // pred_fallthru
        _
      %p266 = scmp.lt.s32.totalorder %s23, 2
      // Predicated region
      $region33: #{tpu_custom_call.1} parent=5 // pred_check
        %p267 = pneg %p266
      $region34: #{tpu_custom_call.1} parent=5 // pred_check_branch
        %269 = sbr.rel (%p267) target = $region36
      $region35: #{tpu_custom_call.1} parent=5 // pred_region
        // Predicated region
        $region37: #{tpu_custom_call.1} parent=35 // pred_check
          %p270 = pneg %p43
        $region38: #{tpu_custom_call.1} parent=35 // pred_check_branch
          %272 = sbr.rel (%p270) target = $region40
        $region39: #{tpu_custom_call.1} parent=35 // pred_region
          %s273 = sand.u32 %s33, 1
          %s274 = scalar_lea.sflag [#allocation4], %s273
          %s275 = sand.u32 %s33, 1
          %s276 = smul.addr %s275, 16
          %s277 = scalar_lea.vmem [#allocation3], %s276
          %s278 = smul.u32 2, %s23
          %s280 = ssub.s32 256, 256
          %281 = vsyncadd %s274, %s280
          %s282 = smul.addr %s278, 2
          %s283 = smul.addr %s282, 64
          %s284 = scalar_lea.hbm %s0, %s283
          %s285 = sshll.u32 %s277, 4
          %s286 = int_to_ptr.vmem [resolvable:$true] %s285
          %291 = dma.hbm_to_vmem [thread:$0]  %s284, 256, %s286, %s274, 64, 64, 4
        $region40: #{tpu_custom_call.1} parent=35 // pred_fallthru
          _
        // Predicated region
        $region41: #{tpu_custom_call.1} parent=35 // pred_check
          %p292 = pneg %p69
        $region42: #{tpu_custom_call.1} parent=35 // pred_check_branch
          %294 = sbr.rel (%p292) target = $region44
        $region43: #{tpu_custom_call.1} parent=35 // pred_region
          %s295 = sand.u32 %s23, 1
          %s296 = scalar_lea.sflag [#allocation7], %s295
          %s297 = sand.u32 %s59, 1
          %s298 = smul.addr %s297, 16
          %s299 = scalar_lea.vmem [#allocation6], %s298
          %s300 = smul.u32 2, %s23
          %s302 = ssub.s32 256, 256
          %303 = vsyncadd %s296, %s302
          %s304 = smul.addr %s300, 2
          %s305 = smul.addr %s304, 64
          %s306 = scalar_lea.hbm %s1, %s305
          %s307 = sshll.u32 %s299, 4
          %s308 = int_to_ptr.vmem [resolvable:$true] %s307
          %313 = dma.hbm_to_vmem [thread:$0]  %s306, 256, %s308, %s296, 64, 64, 4
        $region44: #{tpu_custom_call.1} parent=35 // pred_fallthru
          _
      $region36: #{tpu_custom_call.1} parent=5 // pred_fallthru
        _
      %p314 = scmp.le.s32.totalorder 1, %s23
      %p315 = scmp.lt.s32.totalorder %s23, 3
      %p316 = pnand %p314, %p315
      %p317 = pneg %p316
      // Predicated region
      $region45: #{tpu_custom_call.1} parent=5 // pred_check
        _
      $region46: #{tpu_custom_call.1} parent=5 // pred_check_branch
        %319 = sbr.rel (%p316) target = $region48
      $region47: #{tpu_custom_call.1} parent=5 // pred_region
        %s320 = ssub.s32 %s23, 1
        %s321 = sand.u32 %s36, 1
        %s322 = scalar_lea.sflag [#allocation4], %s321
        %s323 = sand.u32 %s36, 1
        %s324 = smul.addr %s323, 16
        %s325 = scalar_lea.vmem [#allocation3], %s324
        // Predicated region
        $region49: #{tpu_custom_call.1} parent=47 // pred_check
          %p326 = pneg %p49
        $region50: #{tpu_custom_call.1} parent=47 // pred_check_branch
          %328 = sbr.rel (%p326) target = $region52
        $region51: #{tpu_custom_call.1} parent=47 // pred_region
          %329 = dma.done %s322, 256
        $region52: #{tpu_custom_call.1} parent=47 // pred_fallthru
          _
        %s330 = sand.u32 %s28, 1
        %s331 = scalar_lea.sflag [#allocation7], %s330
        %s332 = sand.u32 %s62, 1
        %s333 = smul.addr %s332, 16
        %s334 = scalar_lea.vmem [#allocation6], %s333
        // Predicated region
        $region53: #{tpu_custom_call.1} parent=47 // pred_check
          %p335 = pneg %p75
        $region54: #{tpu_custom_call.1} parent=47 // pred_check_branch
          %337 = sbr.rel (%p335) target = $region56
        $region55: #{tpu_custom_call.1} parent=47 // pred_region
          %338 = dma.done %s331, 256
        $region56: #{tpu_custom_call.1} parent=47 // pred_fallthru
          _
        // Predicated region
        $region57: #{tpu_custom_call.1} parent=47 // pred_check
          %p339 = pneg %p96
        $region58: #{tpu_custom_call.1} parent=47 // pred_check_branch
          %341 = sbr.rel (%p339) target = $region60
        $region59: #{tpu_custom_call.1} parent=47 // pred_region
          %342 = dma.done [#allocation7], 256
        $region60: #{tpu_custom_call.1} parent=47 // pred_fallthru
          _
        // Predicated region
        $region61: #{tpu_custom_call.1} parent=47 // pred_check
          %p343 = pneg %p117
        $region62: #{tpu_custom_call.1} parent=47 // pred_check_branch
          %345 = sbr.rel (%p343) target = $region64
        $region63: #{tpu_custom_call.1} parent=47 // pred_region
          %346 = dma.done [#allocation10], 2048
        $region64: #{tpu_custom_call.1} parent=47 // pred_fallthru
          _
        // Predicated region
        $region65: #{tpu_custom_call.1} parent=47 // pred_check
          %p347 = pneg %p159
        $region66: #{tpu_custom_call.1} parent=47 // pred_check_branch
          %349 = sbr.rel (%p347) target = $region68
        $region67: #{tpu_custom_call.1} parent=47 // pred_region
          %350 = dma.done [#allocation10], 2048
        $region68: #{tpu_custom_call.1} parent=47 // pred_fallthru
          _
        %s351 = sand.u32 %s36, 1
        %s352 = scalar_lea.sflag [#allocation4], %s351
        %s353 = sand.u32 %s36, 1
        %s354 = smul.addr %s353, 16
        %s355 = scalar_lea.vmem [#allocation3], %s354
        %p356 = pneg %p49
        %p357 = pneg %p46
        %s358 = sand.u32 %s28, 1
        %s359 = scalar_lea.sflag [#allocation7], %s358
        %s360 = sand.u32 %s62, 1
        %s361 = smul.addr %s360, 16
        %s362 = scalar_lea.vmem [#allocation6], %s361
        %p363 = pneg %p75
        %p364 = pneg %p72
        %p365 = pneg %p96
        %p366 = pneg %p93
        %p367 = pneg %p117
        %p368 = pneg %p114
        %p369 = pneg %p138
        %p370 = pneg %p135
        %p371 = pneg %p159
        %p372 = pneg %p156
        %p373 = pneg %p180
        %p374 = pneg %p177
        %p375 = pneg %p206
        %p376 = pneg %p203
        %s377 = sand.u32 %s193, 1
        %s378 = scalar_lea.sflag [#allocation5], %s377
        %s379 = sand.u32 %s193, 1
        %s380 = smul.addr %s379, 32
        %s381 = scalar_lea.vmem [#allocation12], %s380
        %s382 = smul.u32 2, %s28
        %s383 = smul.u32 2, %s28
        %s384 = smul.u32 2, %s28
        %vm386 = vcmask 261120
        %387 = vst.msk [vmem:[#allocation2] sm:$0xff] %vm386, 0
        %388 = vst.msk [vmem:[#allocation2 + $0x8] sm:$0xff] %vm386, 0
        %v389 = vld [vmem:[%s325] sm:$0xf]
        %v390 = vld [vmem:[%s325 + $0x4] sm:$0xf]
        %v393 = vunpack.c.l.b16 %v389
        %v394 = vunpack.c.l.b16 %v390
        %v395 = vpack.c.b16 %v394, %v393
        %vm397 = vcmask 130048
        %398 = vst.msk [vmem:[#allocation2] sm:$0xff] %vm397, %v395
        %s399 = scalar_lea.vmem %s325, 8 [#allocation3]
        %v400 = vld [vmem:[%s399] sm:$0xf]
        %v401 = vld [vmem:[%s399 + $0x4] sm:$0xf]
        %v404 = vunpack.c.l.b16 %v400
        %v405 = vunpack.c.l.b16 %v401
        %v406 = vpack.c.b16 %v405, %v404
        %407 = vrot.lane.b32.xlu0 %v406, 16
        %v408 = vpop.permute.xlu0 %407
        %vm410 = vcmask 261248
        %411 = vst.msk [vmem:[#allocation2 + $0x8] sm:$0xff] %vm410, %v408
        %v412 = vld [vmem:[#allocation2] sm:$0xff]
        %v413 = vld [vmem:[#allocation2 + $0x8] sm:$0xff]
        %v414 = vld [vmem:[%s334] sm:$0xf]
        %v415 = vld [vmem:[%s334 + $0x4] sm:$0xf]
        %v416 = vld [vmem:[%s334 + $0x8] sm:$0xf]
        %v417 = vld [vmem:[%s334 + $0xc] sm:$0xf]
        %v418 = vld [vmem:[#allocation8] sm:$0xf]
        %v419 = vld [vmem:[#allocation8 + $0x4] sm:$0xf]
        %v420 = vld [vmem:[#allocation8 + $0x8] sm:$0xf]
        %v421 = vld [vmem:[#allocation8 + $0xc] sm:$0xf]
        %v426 = vunpack.c.l.b16 %v414
        %v427 = vunpack.c.l.b16 %v415
        %v428 = vunpack.c.l.b16 %v416
        %v429 = vunpack.c.l.b16 %v417
        %v430 = vpack.c.b16 %v427, %v426
        %v431 = vpack.c.b16 %v429, %v428
        %v436 = vunpack.c.l.b16 %v418
        %v437 = vunpack.c.l.b16 %v419
        %v438 = vunpack.c.l.b16 %v420
        %v439 = vunpack.c.l.b16 %v421
        %v440 = vpack.c.b16 %v437, %v436
        %v441 = vpack.c.b16 %v439, %v438
        %v445 = vsel %vm386, %v430, 0
        %v448 = vsel %vm386, %v431, 0
        %450 = vmatprep.subr.bf16.mxu0 0
        %451 = vmatpush1.bf16.msra.mxu0 %v440
        %452 = vmatprep.subr.bf16.mxu0 0
        %453 = vmatpush1.bf16.msra.mxu0 %v441
        %454 = vmatprep.subr.bf16.mxu0 0
        %455 = vmatpush1.bf16.msra.mxu0 0
        %456 = vmatprep.subr.bf16.mxu0 0
        %457 = vmatpush1.bf16.msra.mxu0 0
        %458 = vmatprep.subr.bf16.mxu0 0
        %459 = vmatpush1.bf16.msra.mxu0 0
        %460 = vmatprep.subr.bf16.mxu0 0
        %461 = vmatpush1.bf16.msra.mxu0 0
        %462 = vmatprep.subr.bf16.mxu0 0
        %463 = vmatpush1.bf16.msra.mxu0 0
        %464 = vmatprep.subr.bf16.mxu0 0
        %465 = vmatpush1.bf16.msra.mxu0 0
        %466 = vmatprep.subr.bf16.mxu0 0
        %467 = vmatpush1.bf16.msra.mxu0 0
        %468 = vmatprep.subr.bf16.mxu0 0
        %469 = vmatpush1.bf16.msra.mxu0 0
        %470 = vmatprep.subr.bf16.mxu0 0
        %471 = vmatpush1.bf16.msra.mxu0 0
        %472 = vmatprep.subr.bf16.mxu0 0
        %473 = vmatpush1.bf16.msra.mxu0 0
        %474 = vmatprep.subr.bf16.mxu0 0
        %475 = vmatpush1.bf16.msra.mxu0 0
        %476 = vmatprep.subr.bf16.mxu0 0
        %477 = vmatpush1.bf16.msra.mxu0 0
        %478 = vmatprep.subr.bf16.mxu0 0
        %479 = vmatpush1.bf16.msra.mxu0 0
        %480 = vmatprep.subr.bf16.mxu0 0
        %481 = vmatpush1.bf16.msra.mxu0 0
        %482 = vmatprep.mubr.bf16.mxu0 0
        %483 = vmatmul.mubr.bf16.gmra.mrb[0].mxu0 %v445
        %v484 = vpop.f32.mrb[0].mxu0
        %v485 = vadd.f32 0.0, %v484
        %v486 = vpop.f32.mrb[0].mxu0
        %v487 = vpop.f32.mrb[0].mxu0
        %v488 = vadd.f32 0.0, %v487
        %v489 = vpop.f32.mrb[0].mxu0
        %490 = vmatprep.mubr.bf16.mxu0 0
        %491 = vmatmul.mubr.bf16.gmra.mrb[0].mxu0 %v448
        %v492 = vpop.f32.mrb[0].mxu0
        %v493 = vadd.f32 0.0, %v492
        %v494 = vpop.f32.mrb[0].mxu0
        %v495 = vpop.f32.mrb[0].mxu0
        %v496 = vadd.f32 0.0, %v495
        %v497 = vpop.f32.mrb[0].mxu0
        %498 = vdwg.mxu0
        %v499 = vpack.c.bf16 %v488, %v485
        %v500 = vpack.c.bf16 %v496, %v493
        %v502 = vsel %vm386, %v412, 0
        %v505 = vsel %vm386, %v413, 0
        %507 = vmatprep.subr.bf16.mxu0 0
        %508 = vmatpush1.bf16.msra.mxu0 %v499
        %509 = vmatprep.subr.bf16.mxu0 0
        %510 = vmatpush1.bf16.msra.mxu0 %v500
        %511 = vmatprep.subr.bf16.mxu0 0
        %512 = vmatpush1.bf16.msra.mxu0 0
        %513 = vmatprep.subr.bf16.mxu0 0
        %514 = vmatpush1.bf16.msra.mxu0 0
        %515 = vmatprep.subr.bf16.mxu0 0
        %516 = vmatpush1.bf16.msra.mxu0 0
        %517 = vmatprep.subr.bf16.mxu0 0
        %518 = vmatpush1.bf16.msra.mxu0 0
        %519 = vmatprep.subr.bf16.mxu0 0
        %520 = vmatpush1.bf16.msra.mxu0 0
        %521 = vmatprep.subr.bf16.mxu0 0
        %522 = vmatpush1.bf16.msra.mxu0 0
        %523 = vmatprep.subr.bf16.mxu0 0
        %524 = vmatpush1.bf16.msra.mxu0 0
        %525 = vmatprep.subr.bf16.mxu0 0
        %526 = vmatpush1.bf16.msra.mxu0 0
        %527 = vmatprep.subr.bf16.mxu0 0
        %528 = vmatpush1.bf16.msra.mxu0 0
        %529 = vmatprep.subr.bf16.mxu0 0
        %530 = vmatpush1.bf16.msra.mxu0 0
        %531 = vmatprep.subr.bf16.mxu0 0
        %532 = vmatpush1.bf16.msra.mxu0 0
        %533 = vmatprep.subr.bf16.mxu0 0
        %534 = vmatpush1.bf16.msra.mxu0 0
        %535 = vmatprep.subr.bf16.mxu0 0
        %536 = vmatpush1.bf16.msra.mxu0 0
        %537 = vmatprep.subr.bf16.mxu0 0
        %538 = vmatpush1.bf16.msra.mxu0 0
        %539 = vmatprep.mubr.bf16.mxu0 0
        %540 = vmatmul.mubr.bf16.gmra.mrb[0].mxu0 %v502
        %v541 = vpop.f32.mrb[0].mxu0
        %v542 = vadd.f32 0.0, %v541
        %v543 = vpop.f32.mrb[0].mxu0
        %v544 = vpop.f32.mrb[0].mxu0
        %v545 = vadd.f32 0.0, %v544
        %v546 = vpop.f32.mrb[0].mxu0
        %547 = vmatprep.mubr.bf16.mxu0 0
        %548 = vmatmul.mubr.bf16.gmra.mrb[0].mxu0 %v505
        %v549 = vpop.f32.mrb[0].mxu0
        %v550 = vadd.f32 0.0, %v549
        %v551 = vpop.f32.mrb[0].mxu0
        %v552 = vpop.f32.mrb[0].mxu0
        %v553 = vadd.f32 0.0, %v552
        %v554 = vpop.f32.mrb[0].mxu0
        %555 = vdwg.mxu0
        %v556 = vpack.c.bf16 %v545, %v542
        %v557 = vpack.c.bf16 %v553, %v550
        %v558 = vld [vmem:[#allocation9] sm:$0xf]
        %v559 = vld [vmem:[#allocation9 + $0x4] sm:$0xf]
        %v560 = vld [vmem:[#allocation9 + $0x8] sm:$0xf]
        %v561 = vld [vmem:[#allocation9 + $0xc] sm:$0xf]
        %v562 = vld [vmem:[#allocation9 + $0x10] sm:$0xf]
        %v563 = vld [vmem:[#allocation9 + $0x14] sm:$0xf]
        %v564 = vld [vmem:[#allocation9 + $0x18] sm:$0xf]
        %v565 = vld [vmem:[#allocation9 + $0x1c] sm:$0xf]
        %v566 = vld [vmem:[#allocation9 + $0x20] sm:$0xf]
        %v567 = vld [vmem:[#allocation9 + $0x24] sm:$0xf]
        %v568 = vld [vmem:[#allocation9 + $0x28] sm:$0xf]
        %v569 = vld [vmem:[#allocation9 + $0x2c] sm:$0xf]
        %v570 = vld [vmem:[#allocation9 + $0x30] sm:$0xf]
        %v571 = vld [vmem:[#allocation9 + $0x34] sm:$0xf]
        %v572 = vld [vmem:[#allocation9 + $0x38] sm:$0xf]
        %v573 = vld [vmem:[#allocation9 + $0x3c] sm:$0xf]
        %v574 = vld [vmem:[%s4] sm:$0x1]
        %v576 = vlaneseq
        %v577 = vshrl.u32 %v576, 7
        %v578 = vsub.s32 0, %v577
        %v579 = vrot.slane %v574, %v578
        %v597 = vunpack.c.l.b16 %v558
        %v598 = vunpack.c.l.b16 %v559
        %v599 = vunpack.c.l.b16 %v560
        %v600 = vunpack.c.l.b16 %v561
        %v601 = vunpack.c.l.b16 %v562
        %v602 = vunpack.c.l.b16 %v563
        %v603 = vunpack.c.l.b16 %v564
        %v604 = vunpack.c.l.b16 %v565
        %v605 = vunpack.c.l.b16 %v566
        %v606 = vunpack.c.l.b16 %v567
        %v607 = vunpack.c.l.b16 %v568
        %v608 = vunpack.c.l.b16 %v569
        %v609 = vunpack.c.l.b16 %v570
        %v610 = vunpack.c.l.b16 %v571
        %v611 = vunpack.c.l.b16 %v572
        %v612 = vunpack.c.l.b16 %v573
        %v613 = vpack.c.b16 %v598, %v597
        %v614 = vpack.c.b16 %v600, %v599
        %v615 = vpack.c.b16 %v602, %v601
        %v616 = vpack.c.b16 %v604, %v603
        %v617 = vpack.c.b16 %v606, %v605
        %v618 = vpack.c.b16 %v608, %v607
        %v619 = vpack.c.b16 %v610, %v609
        %v620 = vpack.c.b16 %v612, %v611
        %629 = vmatprep.subr.bf16.mxu0 0
        %630 = vmatpush1.bf16.msra.mxu0 %v613
        %631 = vmatprep.subr.bf16.mxu0 0
        %632 = vmatpush1.bf16.msra.mxu0 %v614
        %633 = vmatprep.subr.bf16.mxu0 0
        %634 = vmatpush1.bf16.msra.mxu0 %v615
        %635 = vmatprep.subr.bf16.mxu0 0
        %636 = vmatpush1.bf16.msra.mxu0 %v616
        %637 = vmatprep.subr.bf16.mxu0 0
        %638 = vmatpush1.bf16.msra.mxu0 %v617
        %639 = vmatprep.subr.bf16.mxu0 0
        %640 = vmatpush1.bf16.msra.mxu0 %v618
        %641 = vmatprep.subr.bf16.mxu0 0
        %642 = vmatpush1.bf16.msra.mxu0 %v619
        %643 = vmatprep.subr.bf16.mxu0 0
        %644 = vmatpush1.bf16.msra.mxu0 %v620
        %645 = vmatprep.subr.bf16.mxu0 0
        %646 = vmatpush1.bf16.msra.mxu0 0
        %647 = vmatprep.subr.bf16.mxu0 0
        %648 = vmatpush1.bf16.msra.mxu0 0
        %649 = vmatprep.subr.bf16.mxu0 0
        %650 = vmatpush1.bf16.msra.mxu0 0
        %651 = vmatprep.subr.bf16.mxu0 0
        %652 = vmatpush1.bf16.msra.mxu0 0
        %653 = vmatprep.subr.bf16.mxu0 0
        %654 = vmatpush1.bf16.msra.mxu0 0
        %655 = vmatprep.subr.bf16.mxu0 0
        %656 = vmatpush1.bf16.msra.mxu0 0
        %657 = vmatprep.subr.bf16.mxu0 0
        %658 = vmatpush1.bf16.msra.mxu0 0
        %659 = vmatprep.subr.bf16.mxu0 0
        %660 = vmatpush1.bf16.msra.mxu0 0
        %661 = vmatprep.mubr.bf16.mxu0 0
        %662 = vmatmul.mubr.bf16.gmra.mrb[0].mxu0 %v556
        %v663 = vpop.f32.mrb[0].mxu0
        %v664 = vadd.f32 %v579, %v663
        %v665 = vpop.f32.mrb[0].mxu0
        %v666 = vpop.f32.mrb[0].mxu0
        %v667 = vadd.f32 %v579, %v666
        %v668 = vpop.f32.mrb[0].mxu0
        %669 = vmatprep.mubr.bf16.mxu0 0
        %670 = vmatmul.mubr.bf16.gmra.mrb[0].mxu0 %v557
        %v671 = vpop.f32.mrb[0].mxu0
        %v672 = vadd.f32 %v579, %v671
        %v673 = vpop.f32.mrb[0].mxu0
        %v674 = vpop.f32.mrb[0].mxu0
        %v675 = vadd.f32 %v579, %v674
        %v676 = vpop.f32.mrb[0].mxu0
        %677 = vdwg.mxu0
        %v678 = vld [vmem:[#allocation11] sm:$0xf]
        %v679 = vld [vmem:[#allocation11 + $0x4] sm:$0xf]
        %v680 = vld [vmem:[#allocation11 + $0x8] sm:$0xf]
        %v681 = vld [vmem:[#allocation11 + $0xc] sm:$0xf]
        %v682 = vld [vmem:[#allocation11 + $0x10] sm:$0xf]
        %v683 = vld [vmem:[#allocation11 + $0x14] sm:$0xf]
        %v684 = vld [vmem:[#allocation11 + $0x18] sm:$0xf]
        %v685 = vld [vmem:[#allocation11 + $0x1c] sm:$0xf]
        %v686 = vld [vmem:[#allocation11 + $0x20] sm:$0xf]
        %v687 = vld [vmem:[#allocation11 + $0x24] sm:$0xf]
        %v688 = vld [vmem:[#allocation11 + $0x28] sm:$0xf]
        %v689 = vld [vmem:[#allocation11 + $0x2c] sm:$0xf]
        %v690 = vld [vmem:[#allocation11 + $0x30] sm:$0xf]
        %v691 = vld [vmem:[#allocation11 + $0x34] sm:$0xf]
        %v692 = vld [vmem:[#allocation11 + $0x38] sm:$0xf]
        %v693 = vld [vmem:[#allocation11 + $0x3c] sm:$0xf]
        %v694 = vld [vmem:[%s6] sm:$0x1]
        %v696 = vlaneseq
        %v697 = vshrl.u32 %v696, 7
        %v698 = vsub.s32 0, %v697
        %v699 = vrot.slane %v694, %v698
        %v717 = vunpack.c.l.b16 %v678
        %v718 = vunpack.c.l.b16 %v679
        %v719 = vunpack.c.l.b16 %v680
        %v720 = vunpack.c.l.b16 %v681
        %v721 = vunpack.c.l.b16 %v682
        %v722 = vunpack.c.l.b16 %v683
        %v723 = vunpack.c.l.b16 %v684
        %v724 = vunpack.c.l.b16 %v685
        %v725 = vunpack.c.l.b16 %v686
        %v726 = vunpack.c.l.b16 %v687
        %v727 = vunpack.c.l.b16 %v688
        %v728 = vunpack.c.l.b16 %v689
        %v729 = vunpack.c.l.b16 %v690
        %v730 = vunpack.c.l.b16 %v691
        %v731 = vunpack.c.l.b16 %v692
        %v732 = vunpack.c.l.b16 %v693
        %v733 = vpack.c.b16 %v718, %v717
        %v734 = vpack.c.b16 %v720, %v719
        %v735 = vpack.c.b16 %v722, %v721
        %v736 = vpack.c.b16 %v724, %v723
        %v737 = vpack.c.b16 %v726, %v725
        %v738 = vpack.c.b16 %v728, %v727
        %v739 = vpack.c.b16 %v730, %v729
        %v740 = vpack.c.b16 %v732, %v731
        %749 = vmatprep.subr.bf16.mxu0 0
        %750 = vmatpush1.bf16.msra.mxu0 %v733
        %751 = vmatprep.subr.bf16.mxu0 0
        %752 = vmatpush1.bf16.msra.mxu0 %v734
        %753 = vmatprep.subr.bf16.mxu0 0
        %754 = vmatpush1.bf16.msra.mxu0 %v735
        %755 = vmatprep.subr.bf16.mxu0 0
        %756 = vmatpush1.bf16.msra.mxu0 %v736
        %757 = vmatprep.subr.bf16.mxu0 0
        %758 = vmatpush1.bf16.msra.mxu0 %v737
        %759 = vmatprep.subr.bf16.mxu0 0
        %760 = vmatpush1.bf16.msra.mxu0 %v738
        %761 = vmatprep.subr.bf16.mxu0 0
        %762 = vmatpush1.bf16.msra.mxu0 %v739
        %763 = vmatprep.subr.bf16.mxu0 0
        %764 = vmatpush1.bf16.msra.mxu0 %v740
        %765 = vmatprep.subr.bf16.mxu0 0
        %766 = vmatpush1.bf16.msra.mxu0 0
        %767 = vmatprep.subr.bf16.mxu0 0
        %768 = vmatpush1.bf16.msra.mxu0 0
        %769 = vmatprep.subr.bf16.mxu0 0
        %770 = vmatpush1.bf16.msra.mxu0 0
        %771 = vmatprep.subr.bf16.mxu0 0
        %772 = vmatpush1.bf16.msra.mxu0 0
        %773 = vmatprep.subr.bf16.mxu0 0
        %774 = vmatpush1.bf16.msra.mxu0 0
        %775 = vmatprep.subr.bf16.mxu0 0
        %776 = vmatpush1.bf16.msra.mxu0 0
        %777 = vmatprep.subr.bf16.mxu0 0
        %778 = vmatpush1.bf16.msra.mxu0 0
        %779 = vmatprep.subr.bf16.mxu0 0
        %780 = vmatpush1.bf16.msra.mxu0 0
        %781 = vmatprep.mubr.bf16.mxu0 0
        %782 = vmatmul.mubr.bf16.gmra.mrb[0].mxu0 %v499
        %v783 = vpop.f32.mrb[0].mxu0
        %v784 = vadd.f32 %v699, %v783
        %v785 = vpop.f32.mrb[0].mxu0
        %v786 = vpop.f32.mrb[0].mxu0
        %v787 = vadd.f32 %v699, %v786
        %v788 = vpop.f32.mrb[0].mxu0
        %789 = vmatprep.mubr.bf16.mxu0 0
        %790 = vmatmul.mubr.bf16.gmra.mrb[0].mxu0 %v500
        %v791 = vpop.f32.mrb[0].mxu0
        %v792 = vadd.f32 %v699, %v791
        %v793 = vpop.f32.mrb[0].mxu0
        %v794 = vpop.f32.mrb[0].mxu0
        %v795 = vadd.f32 %v699, %v794
        %v796 = vpop.f32.mrb[0].mxu0
        %797 = vdwg.mxu0
        %v798 = vmax.f32 %v664, 0.0
        %v799 = vmax.f32 %v667, 0.0
        %v800 = vmax.f32 %v672, 0.0
        %v801 = vmax.f32 %v675, 0.0
        %v802 = vmax.f32 %v784, 0.0
        %v803 = vmax.f32 %v787, 0.0
        %v804 = vmax.f32 %v792, 0.0
        %v805 = vmax.f32 %v795, 0.0
        %v806 = vadd.f32 %v798, %v802
        %v807 = vadd.f32 %v799, %v803
        %v808 = vadd.f32 %v800, %v804
        %v809 = vadd.f32 %v801, %v805
        %v810 = vpack.c.bf16 %v807, %v806
        %v811 = vpack.c.bf16 %v809, %v808
        %812 = vmatprep.subr.bf16.mxu0 0
        %813 = vmatpush1.bf16.msra.mxu0 %v810
        %814 = vmatprep.subr.bf16.mxu0 0
        %815 = vmatpush1.bf16.msra.mxu0 %v811
        %816 = vmatprep.subr.bf16.mxu0 0
        %817 = vmatpush1.bf16.msra.mxu0 0
        %818 = vmatprep.subr.bf16.mxu0 0
        %819 = vmatpush1.bf16.msra.mxu0 0
        %820 = vmatprep.subr.bf16.mxu0 0
        %821 = vmatpush1.bf16.msra.mxu0 0
        %822 = vmatprep.subr.bf16.mxu0 0
        %823 = vmatpush1.bf16.msra.mxu0 0
        %824 = vmatprep.subr.bf16.mxu0 0
        %825 = vmatpush1.bf16.msra.mxu0 0
        %826 = vmatprep.subr.bf16.mxu0 0
        %827 = vmatpush1.bf16.msra.mxu0 0
        %828 = vmatprep.subr.bf16.mxu0 0
        %829 = vmatpush1.bf16.msra.mxu0 0
        %830 = vmatprep.subr.bf16.mxu0 0
        %831 = vmatpush1.bf16.msra.mxu0 0
        %832 = vmatprep.subr.bf16.mxu0 0
        %833 = vmatpush1.bf16.msra.mxu0 0
        %834 = vmatprep.subr.bf16.mxu0 0
        %835 = vmatpush1.bf16.msra.mxu0 0
        %836 = vmatprep.subr.bf16.mxu0 0
        %837 = vmatpush1.bf16.msra.mxu0 0
        %838 = vmatprep.subr.bf16.mxu0 0
        %839 = vmatpush1.bf16.msra.mxu0 0
        %840 = vmatprep.subr.bf16.mxu0 0
        %841 = vmatpush1.bf16.msra.mxu0 0
        %842 = vmatprep.subr.bf16.mxu0 0
        %843 = vmatpush1.bf16.msra.mxu0 0
        %844 = vmatprep.mubr.bf16.mxu0 0
        %845 = vmatmul.mubr.bf16.gmra.mrb[0].mxu0 %v502
        %v846 = vpop.f32.mrb[0].mxu0
        %v847 = vadd.f32 0.0, %v846
        %v848 = vpop.f32.mrb[0].mxu0
        %v849 = vpop.f32.mrb[0].mxu0
        %v850 = vadd.f32 0.0, %v849
        %v851 = vpop.f32.mrb[0].mxu0
        %852 = vmatprep.mubr.bf16.mxu0 0
        %853 = vmatmul.mubr.bf16.gmra.mrb[0].mxu0 %v505
        %v854 = vpop.f32.mrb[0].mxu0
        %v855 = vadd.f32 0.0, %v854
        %v856 = vpop.f32.mrb[0].mxu0
        %v857 = vpop.f32.mrb[0].mxu0
        %v858 = vadd.f32 0.0, %v857
        %v859 = vpop.f32.mrb[0].mxu0
        %860 = vdwg.mxu0
        %v861 = vpack.c.bf16 %v850, %v847
        %v862 = vpack.c.bf16 %v858, %v855
        %s863 = scalar_lea.vmem [#allocation9], 64
        %v864 = vld [vmem:[%s863] sm:$0xf]
        %v865 = vld [vmem:[%s863 + $0x4] sm:$0xf]
        %v866 = vld [vmem:[%s863 + $0x8] sm:$0xf]
        %v867 = vld [vmem:[%s863 + $0xc] sm:$0xf]
        %v868 = vld [vmem:[%s863 + $0x10] sm:$0xf]
        %v869 = vld [vmem:[%s863 + $0x14] sm:$0xf]
        %v870 = vld [vmem:[%s863 + $0x18] sm:$0xf]
        %v871 = vld [vmem:[%s863 + $0x1c] sm:$0xf]
        %v872 = vld [vmem:[%s863 + $0x20] sm:$0xf]
        %v873 = vld [vmem:[%s863 + $0x24] sm:$0xf]
        %v874 = vld [vmem:[%s863 + $0x28] sm:$0xf]
        %v875 = vld [vmem:[%s863 + $0x2c] sm:$0xf]
        %v876 = vld [vmem:[%s863 + $0x30] sm:$0xf]
        %v877 = vld [vmem:[%s863 + $0x34] sm:$0xf]
        %v878 = vld [vmem:[%s863 + $0x38] sm:$0xf]
        %v879 = vld [vmem:[%s863 + $0x3c] sm:$0xf]
        %s880 = scalar_lea.vmem %s4, 1
        %v881 = vld [vmem:[%s880] sm:$0x1]
        %v883 = vlaneseq
        %v884 = vshrl.u32 %v883, 7
        %v885 = vsub.s32 0, %v884
        %v886 = vrot.slane %v881, %v885
        %v904 = vunpack.c.l.b16 %v864
        %v905 = vunpack.c.l.b16 %v865
        %v906 = vunpack.c.l.b16 %v866
        %v907 = vunpack.c.l.b16 %v867
        %v908 = vunpack.c.l.b16 %v868
        %v909 = vunpack.c.l.b16 %v869
        %v910 = vunpack.c.l.b16 %v870
        %v911 = vunpack.c.l.b16 %v871
        %v912 = vunpack.c.l.b16 %v872
        %v913 = vunpack.c.l.b16 %v873
        %v914 = vunpack.c.l.b16 %v874
        %v915 = vunpack.c.l.b16 %v875
        %v916 = vunpack.c.l.b16 %v876
        %v917 = vunpack.c.l.b16 %v877
        %v918 = vunpack.c.l.b16 %v878
        %v919 = vunpack.c.l.b16 %v879
        %v920 = vpack.c.b16 %v905, %v904
        %v921 = vpack.c.b16 %v907, %v906
        %v922 = vpack.c.b16 %v909, %v908
        %v923 = vpack.c.b16 %v911, %v910
        %v924 = vpack.c.b16 %v913, %v912
        %v925 = vpack.c.b16 %v915, %v914
        %v926 = vpack.c.b16 %v917, %v916
        %v927 = vpack.c.b16 %v919, %v918
        %936 = vmatprep.subr.bf16.mxu0 0
        %937 = vmatpush1.bf16.msra.mxu0 %v920
        %938 = vmatprep.subr.bf16.mxu0 0
        %939 = vmatpush1.bf16.msra.mxu0 %v921
        %940 = vmatprep.subr.bf16.mxu0 0
        %941 = vmatpush1.bf16.msra.mxu0 %v922
        %942 = vmatprep.subr.bf16.mxu0 0
        %943 = vmatpush1.bf16.msra.mxu0 %v923
        %944 = vmatprep.subr.bf16.mxu0 0
        %945 = vmatpush1.bf16.msra.mxu0 %v924
        %946 = vmatprep.subr.bf16.mxu0 0
        %947 = vmatpush1.bf16.msra.mxu0 %v925
        %948 = vmatprep.subr.bf16.mxu0 0
        %949 = vmatpush1.bf16.msra.mxu0 %v926
        %950 = vmatprep.subr.bf16.mxu0 0
        %951 = vmatpush1.bf16.msra.mxu0 %v927
        %952 = vmatprep.subr.bf16.mxu0 0
        %953 = vmatpush1.bf16.msra.mxu0 0
        %954 = vmatprep.subr.bf16.mxu0 0
        %955 = vmatpush1.bf16.msra.mxu0 0
        %956 = vmatprep.subr.bf16.mxu0 0
        %957 = vmatpush1.bf16.msra.mxu0 0
        %958 = vmatprep.subr.bf16.mxu0 0
        %959 = vmatpush1.bf16.msra.mxu0 0
        %960 = vmatprep.subr.bf16.mxu0 0
        %961 = vmatpush1.bf16.msra.mxu0 0
        %962 = vmatprep.subr.bf16.mxu0 0
        %963 = vmatpush1.bf16.msra.mxu0 0
        %964 = vmatprep.subr.bf16.mxu0 0
        %965 = vmatpush1.bf16.msra.mxu0 0
        %966 = vmatprep.subr.bf16.mxu0 0
        %967 = vmatpush1.bf16.msra.mxu0 0
        %968 = vmatprep.mubr.bf16.mxu0 0
        %969 = vmatmul.mubr.bf16.gmra.mrb[0].mxu0 %v861
        %v970 = vpop.f32.mrb[0].mxu0
        %v971 = vadd.f32 %v886, %v970
        %v972 = vpop.f32.mrb[0].mxu0
        %v973 = vpop.f32.mrb[0].mxu0
        %v974 = vadd.f32 %v886, %v973
        %v975 = vpop.f32.mrb[0].mxu0
        %976 = vmatprep.mubr.bf16.mxu0 0
        %977 = vmatmul.mubr.bf16.gmra.mrb[0].mxu0 %v862
        %v978 = vpop.f32.mrb[0].mxu0
        %v979 = vadd.f32 %v886, %v978
        %v980 = vpop.f32.mrb[0].mxu0
        %v981 = vpop.f32.mrb[0].mxu0
        %v982 = vadd.f32 %v886, %v981
        %v983 = vpop.f32.mrb[0].mxu0
        %984 = vdwg.mxu0
        %s985 = scalar_lea.vmem [#allocation11], 64
        %v986 = vld [vmem:[%s985] sm:$0xf]
        %v987 = vld [vmem:[%s985 + $0x4] sm:$0xf]
        %v988 = vld [vmem:[%s985 + $0x8] sm:$0xf]
        %v989 = vld [vmem:[%s985 + $0xc] sm:$0xf]
        %v990 = vld [vmem:[%s985 + $0x10] sm:$0xf]
        %v991 = vld [vmem:[%s985 + $0x14] sm:$0xf]
        %v992 = vld [vmem:[%s985 + $0x18] sm:$0xf]
        %v993 = vld [vmem:[%s985 + $0x1c] sm:$0xf]
        %v994 = vld [vmem:[%s985 + $0x20] sm:$0xf]
        %v995 = vld [vmem:[%s985 + $0x24] sm:$0xf]
        %v996 = vld [vmem:[%s985 + $0x28] sm:$0xf]
        %v997 = vld [vmem:[%s985 + $0x2c] sm:$0xf]
        %v998 = vld [vmem:[%s985 + $0x30] sm:$0xf]
        %v999 = vld [vmem:[%s985 + $0x34] sm:$0xf]
        %v1000 = vld [vmem:[%s985 + $0x38] sm:$0xf]
        %v1001 = vld [vmem:[%s985 + $0x3c] sm:$0xf]
        %s1002 = scalar_lea.vmem %s6, 1
        %v1003 = vld [vmem:[%s1002] sm:$0x1]
        %v1005 = vlaneseq
        %v1006 = vshrl.u32 %v1005, 7
        %v1007 = vsub.s32 0, %v1006
        %v1008 = vrot.slane %v1003, %v1007
        %v1026 = vunpack.c.l.b16 %v986
        %v1027 = vunpack.c.l.b16 %v987
        %v1028 = vunpack.c.l.b16 %v988
        %v1029 = vunpack.c.l.b16 %v989
        %v1030 = vunpack.c.l.b16 %v990
        %v1031 = vunpack.c.l.b16 %v991
        %v1032 = vunpack.c.l.b16 %v992
        %v1033 = vunpack.c.l.b16 %v993
        %v1034 = vunpack.c.l.b16 %v994
        %v1035 = vunpack.c.l.b16 %v995
        %v1036 = vunpack.c.l.b16 %v996
        %v1037 = vunpack.c.l.b16 %v997
        %v1038 = vunpack.c.l.b16 %v998
        %v1039 = vunpack.c.l.b16 %v999
        %v1040 = vunpack.c.l.b16 %v1000
        %v1041 = vunpack.c.l.b16 %v1001
        %v1042 = vpack.c.b16 %v1027, %v1026
        %v1043 = vpack.c.b16 %v1029, %v1028
        %v1044 = vpack.c.b16 %v1031, %v1030
        %v1045 = vpack.c.b16 %v1033, %v1032
        %v1046 = vpack.c.b16 %v1035, %v1034
        %v1047 = vpack.c.b16 %v1037, %v1036
        %v1048 = vpack.c.b16 %v1039, %v1038
        %v1049 = vpack.c.b16 %v1041, %v1040
        %1058 = vmatprep.subr.bf16.mxu0 0
        %1059 = vmatpush1.bf16.msra.mxu0 %v1042
        %1060 = vmatprep.subr.bf16.mxu0 0
        %1061 = vmatpush1.bf16.msra.mxu0 %v1043
        %1062 = vmatprep.subr.bf16.mxu0 0
        %1063 = vmatpush1.bf16.msra.mxu0 %v1044
        %1064 = vmatprep.subr.bf16.mxu0 0
        %1065 = vmatpush1.bf16.msra.mxu0 %v1045
        %1066 = vmatprep.subr.bf16.mxu0 0
        %1067 = vmatpush1.bf16.msra.mxu0 %v1046
        %1068 = vmatprep.subr.bf16.mxu0 0
        %1069 = vmatpush1.bf16.msra.mxu0 %v1047
        %1070 = vmatprep.subr.bf16.mxu0 0
        %1071 = vmatpush1.bf16.msra.mxu0 %v1048
        %1072 = vmatprep.subr.bf16.mxu0 0
        %1073 = vmatpush1.bf16.msra.mxu0 %v1049
        %1074 = vmatprep.subr.bf16.mxu0 0
        %1075 = vmatpush1.bf16.msra.mxu0 0
        %1076 = vmatprep.subr.bf16.mxu0 0
        %1077 = vmatpush1.bf16.msra.mxu0 0
        %1078 = vmatprep.subr.bf16.mxu0 0
        %1079 = vmatpush1.bf16.msra.mxu0 0
        %1080 = vmatprep.subr.bf16.mxu0 0
        %1081 = vmatpush1.bf16.msra.mxu0 0
        %1082 = vmatprep.subr.bf16.mxu0 0
        %1083 = vmatpush1.bf16.msra.mxu0 0
        %1084 = vmatprep.subr.bf16.mxu0 0
        %1085 = vmatpush1.bf16.msra.mxu0 0
        %1086 = vmatprep.subr.bf16.mxu0 0
        %1087 = vmatpush1.bf16.msra.mxu0 0
        %1088 = vmatprep.subr.bf16.mxu0 0
        %1089 = vmatpush1.bf16.msra.mxu0 0
        %1090 = vmatprep.mubr.bf16.mxu0 0
        %1091 = vmatmul.mubr.bf16.gmra.mrb[0].mxu0 %v810
        %v1092 = vpop.f32.mrb[0].mxu0
        %v1093 = vadd.f32 %v1008, %v1092
        %v1094 = vpop.f32.mrb[0].mxu0
        %v1095 = vpop.f32.mrb[0].mxu0
        %v1096 = vadd.f32 %v1008, %v1095
        %v1097 = vpop.f32.mrb[0].mxu0
        %1098 = vmatprep.mubr.bf16.mxu0 0
        %1099 = vmatmul.mubr.bf16.gmra.mrb[0].mxu0 %v811
        %v1100 = vpop.f32.mrb[0].mxu0
        %v1101 = vadd.f32 %v1008, %v1100
        %v1102 = vpop.f32.mrb[0].mxu0
        %v1103 = vpop.f32.mrb[0].mxu0
        %v1104 = vadd.f32 %v1008, %v1103
        %v1105 = vpop.f32.mrb[0].mxu0
        %1106 = vdwg.mxu0
        %v1107 = vmax.f32 %v971, 0.0
        %v1108 = vmax.f32 %v974, 0.0
        %v1109 = vmax.f32 %v979, 0.0
        %v1110 = vmax.f32 %v982, 0.0
        %v1111 = vmax.f32 %v1093, 0.0
        %v1112 = vmax.f32 %v1096, 0.0
        %v1113 = vmax.f32 %v1101, 0.0
        %v1114 = vmax.f32 %v1104, 0.0
        %v1115 = vadd.f32 %v1107, %v1111
        %v1116 = vadd.f32 %v1108, %v1112
        %v1117 = vadd.f32 %v1109, %v1113
        %v1118 = vadd.f32 %v1110, %v1114
        %1119 = vst [vmem:[%s381] sm:$0xff] %v1115
        %1120 = vst [vmem:[%s381 + $0x8] sm:$0xff] %v1116
        %1121 = vst [vmem:[%s381 + $0x10] sm:$0xff] %v1117
        %1122 = vst [vmem:[%s381 + $0x18] sm:$0xff] %v1118
        %s1123 = sand.u32 %s193, 1
        %s1124 = scalar_lea.sflag [#allocation5], %s1123
        %s1125 = sand.u32 %s193, 1
        %s1126 = smul.addr %s1125, 32
        %s1127 = scalar_lea.vmem [#allocation12], %s1126
        // Predicated region
        $region69: #{tpu_custom_call.1} parent=47 // pred_check
          %p1128 = pneg %p203
        $region70: #{tpu_custom_call.1} parent=47 // pred_check_branch
          %1130 = sbr.rel (%p1128) target = $region72
        $region71: #{tpu_custom_call.1} parent=47 // pred_region
          %s1131 = smul.u32 2, %s28
          %s1133 = ssub.s32 512, 512
          %1134 = vsyncadd %s1124, %s1133
          %s1135 = smul.addr %s1131, 2
          %s1136 = smul.addr %s1135, 128
          %s1137 = scalar_lea.hbm %s7, %s1136
          %s1138 = sshll.u32 %s1127, 4
          %s1139 = int_to_ptr.vmem [resolvable:$true] %s1138
          %1144 = dma.vmem_to_hbm [thread:$0]  %s1139, 512, %s1137, %s1124, 128, 128, 8
        $region72: #{tpu_custom_call.1} parent=47 // pred_fallthru
          _
      $region48: #{tpu_custom_call.1} parent=5 // pred_fallthru
        _
      %p1145 = scmp.le.s32.totalorder 2, %s23
      // Predicated region
      $region73: #{tpu_custom_call.1} parent=5 // pred_check
        %p1146 = pneg %p1145
      $region74: #{tpu_custom_call.1} parent=5 // pred_check_branch
        %1148 = sbr.rel (%p1146) target = $region76
      $region75: #{tpu_custom_call.1} parent=5 // pred_region
        %s1149 = ssub.s32 %s23, 2
        // Predicated region
        $region77: #{tpu_custom_call.1} parent=75 // pred_check
          %p1150 = pneg %p209
        $region78: #{tpu_custom_call.1} parent=75 // pred_check_branch
          %1152 = sbr.rel (%p1150) target = $region80
        $region79: #{tpu_custom_call.1} parent=75 // pred_region
          %s1153 = sand.u32 %s194, 1
          %s1154 = scalar_lea.sflag [#allocation5], %s1153
          %s1155 = sand.u32 %s194, 1
          %s1156 = smul.addr %s1155, 32
          %s1157 = scalar_lea.vmem [#allocation12], %s1156
          %1158 = dma.done %s1154, 512
        $region80: #{tpu_custom_call.1} parent=75 // pred_fallthru
          _
      $region76: #{tpu_custom_call.1} parent=5 // pred_fallthru
        _
    $region6: #{tpu_custom_call.1} parent=1 // loop_footer
      %s27 = sadd.s32 1, %s23
    $region7: #{tpu_custom_call.1} parent=1 // loop_footer_branch
      %22 = sbr.rel target = $region3
    $region8: #{tpu_custom_call.1} parent=1 // loop_exit
      _
    %1159 = vsyncpa [#allocation4], 1
    %s1160 = scalar_lea.sflag [#allocation4], 1
    %1161 = vsyncpa %s1160, 1
    %1162 = vsyncpa [#allocation7], 1
    %s1163 = scalar_lea.sflag [#allocation7], 1
    %1164 = vsyncpa %s1163, 1
    %1165 = vsyncpa [#allocation10], 1
    %1166 = vsyncpa [#allocation5], 1
    %s1167 = scalar_lea.sflag [#allocation5], 1
    %1168 = vsyncpa %s1167, 1

</llo_original>
